<compile_context>
chip_gen: v7x
topology: tpu7x:2x2x1
jax: 0.10.0
libtpu: 0.0.40
codegen_flags: <defaults>
</compile_context>

<pallas_src>
import functools

import jax
import jax.numpy as jnp
from jax.experimental import pallas as pl
from jax.experimental.pallas import tpu as pltpu

EPS = 1e-5
LANE = 128


# --------------------------------------------------------------------------- #
# Kernel: one fused  Linear -> BatchNorm1d(batch stats) -> ReLU  (+ residual)  #
# --------------------------------------------------------------------------- #
def _linear_bn_relu_kernel(*refs, add_residual: bool):
    if add_residual:
        x_ref, w_ref, gb_ref, res_ref, o_ref, acc_ref = refs
    else:
        x_ref, w_ref, gb_ref, o_ref, acc_ref = refs
        res_ref = None

    k = pl.program_id(1)

    @pl.when(k == 0)
    def _():
        acc_ref[...] = jnp.zeros_like(acc_ref)

    # (B, TK) @ (TK, TN) -> f32 accumulation on the MXU.
    acc_ref[...] += jnp.dot(x_ref[...], w_ref[...],
                            preferred_element_type=jnp.float32)

    @pl.when(k == pl.num_programs(1) - 1)
    def _():
        h = acc_ref[...]                                     # (B, TN) f32
        mean = jnp.mean(h, axis=0, keepdims=True)            # (1, TN)
        hc = h - mean
        var = jnp.mean(hc * hc, axis=0, keepdims=True)       # biased variance
        gamma = gb_ref[0:1, :]
        beta = gb_ref[1:2, :]
        scale = gamma * jax.lax.rsqrt(var + EPS)              # (1, TN)
        shift = beta - mean * scale
        y = jnp.maximum(h * scale + shift, 0.0)
        if add_residual:                                      # static flag
            y = y + res_ref[...]
        o_ref[...] = y.astype(o_ref.dtype)


# --------------------------------------------------------------------------- #
# Per-layer wrapper                                                            #
# --------------------------------------------------------------------------- #
def _pick_tile(dim: int, cap: int = 512) -> int:
    t = min(dim, cap)
    while dim % t:
        t -= LANE
    return t


def _linear_bn_relu(x, w, gb, residual=None):
    """x: (B, K_pad) f32, w: (K_pad, N_pad) f32, gb: (2, N_pad) [gamma; beta]."""
    B, K = x.shape
    _, N = w.shape
    TN = _pick_tile(N)
    TK = _pick_tile(K)
    grid = (N // TN, K // TK)

    kernel = functools.partial(_linear_bn_relu_kernel,
                               add_residual=residual is not None)

    in_specs = [
        pl.BlockSpec((B, TK), lambda n, k: (0, k)),     # x column block
        pl.BlockSpec((TK, TN), lambda n, k: (k, n)),    # weight tile
        pl.BlockSpec((2, TN), lambda n, k: (0, n)),     # stacked gamma/beta
    ]
    args = [x, w, gb]
    if residual is not None:
        in_specs.append(pl.BlockSpec((B, TN), lambda n, k: (0, n)))
        args.append(residual)

    return pl.pallas_call(
        kernel,
        out_shape=jax.ShapeDtypeStruct((B, N), jnp.float32),
        grid_spec=pltpu.PrefetchScalarGridSpec(
            num_scalar_prefetch=0,
            grid=grid,
            in_specs=in_specs,
            out_specs=pl.BlockSpec((B, TN), lambda n, k: (0, n)),
            scratch_shapes=[pltpu.VMEM((B, TN), jnp.float32)],
        ),
        compiler_params=pltpu.CompilerParams(
            dimension_semantics=("parallel", "arbitrary"),
            vmem_limit_bytes=48 << 20,   # safe on v7x (64 MiB) and ample on v5e/v6e
        ),
    )(*args)


# --------------------------------------------------------------------------- #
# Full SparseEncoder forward                                                   #
# --------------------------------------------------------------------------- #
def _round_up(x: int, m: int = LANE) -> int:
    return ((x + m - 1) // m) * m


def _pad_last(a, target, value=0.0):
    pad = target - a.shape[-1]
    if pad == 0:
        return a
    cfg = [(0, 0)] * (a.ndim - 1) + [(0, pad)]
    return jnp.pad(a, cfg, constant_values=value)


def sparse_encoder_forward(x, params):
    """x: (batch, input_dim) float32. params: dict (weights stored as (in, out))."""
    batch, input_dim = x.shape
    hidden_dim = params["w1"].shape[1]
    add_residual = (input_dim == hidden_dim)

    d_pad = _round_up(input_dim)
    h_pad = _round_up(hidden_dim)

    x_p = _pad_last(x.astype(jnp.float32), d_pad)
    w1_p = _pad_last(jnp.pad(params["w1"], ((0, d_pad - input_dim), (0, 0))), h_pad)
    w2_p = _pad_last(jnp.pad(params["w2"], ((0, h_pad - hidden_dim), (0, 0))), h_pad)
    # Note: b1/b2 are intentionally NOT passed to the kernel (BN mean cancels them).
    gb1 = jnp.stack([_pad_last(params["g1"], h_pad, 1.0),
                     _pad_last(params["beta1"], h_pad, 0.0)], axis=0)
    gb2 = jnp.stack([_pad_last(params["g2"], h_pad, 1.0),
                     _pad_last(params["beta2"], h_pad, 0.0)], axis=0)

    h = _linear_bn_relu(x_p, w1_p, gb1)
    out = _linear_bn_relu(h, w2_p, gb2,
                          residual=x_p if add_residual else None)
    return out[:, :hidden_dim]


# --------------------------------------------------------------------------- #
# Params / reference                                                           #
# --------------------------------------------------------------------------- #
def init_params(key, input_dim, hidden_dim):
    """PyTorch-like init. Linear weights stored transposed: (in, out)."""
    k1, k2, k3, k4 = jax.random.split(key, 4)
    s1 = 1.0 / jnp.sqrt(input_dim)
    s2 = 1.0 / jnp.sqrt(hidden_dim)
    return {
        "w1": jax.random.uniform(k1, (input_dim, hidden_dim), jnp.float32, -s1, s1),
        "b1": jax.random.uniform(k2, (hidden_dim,), jnp.float32, -s1, s1),
        "g1": jnp.ones((hidden_dim,), jnp.float32),
        "beta1": jnp.zeros((hidden_dim,), jnp.float32),
        "w2": jax.random.uniform(k3, (hidden_dim, hidden_dim), jnp.float32, -s2, s2),
        "b2": jax.random.uniform(k4, (hidden_dim,), jnp.float32, -s2, s2),
        "g2": jnp.ones((hidden_dim,), jnp.float32),
        "beta2": jnp.zeros((hidden_dim,), jnp.float32),
    }


def _reference(x, p):
    """Pure-JAX reference mirroring PyTorch training-mode forward (with biases)."""
    h = x @ p["w1"] + p["b1"]
    m = h.mean(0, keepdims=True)
    v = ((h - m) ** 2).mean(0, keepdims=True)
    h = jnp.maximum((h - m) * jax.lax.rsqrt(v + EPS) * p["g1"] + p["beta1"], 0.0)
    o = h @ p["w2"] + p["b2"]
    m = o.mean(0, keepdims=True)
    v = ((o - m) ** 2).mean(0, keepdims=True)
    o = jnp.maximum((o - m) * jax.lax.rsqrt(v + EPS) * p["g2"] + p["beta2"], 0.0)
    if x.shape[-1] == o.shape[-1]:
        o = o + x
    return o


if __name__ == "__main__":
    key = jax.random.PRNGKey(0)
    kx, kp, kx2, kp2 = jax.random.split(key, 4)

    # Case 1: over-complete (hidden_dim > input_dim), no residual.
    batch, input_dim, hidden_dim = 8, 32, 64
    x = jax.random.normal(kx, (batch, input_dim), jnp.float32)
    params = init_params(kp, input_dim, hidden_dim)
    out = jax.block_until_ready(sparse_encoder_forward(x, params))
    ref = _reference(x, params)
    assert out.shape == (batch, hidden_dim)
    assert jnp.allclose(out, ref, atol=1e-4, rtol=1e-4), "mismatch vs reference (no-residual)"

    # Case 2: input_dim == hidden_dim -> residual path exercised.
    x2 = jax.random.normal(kx2, (batch, hidden_dim), jnp.float32)
    params2 = init_params(kp2, hidden_dim, hidden_dim)
    out2 = jax.block_until_ready(sparse_encoder_forward(x2, params2))
    ref2 = _reference(x2, params2)
    assert out2.shape == (batch, hidden_dim)
    assert jnp.allclose(out2, ref2, atol=1e-4, rtol=1e-4), "mismatch vs reference (residual)"

    # TODO(synk): BatchNorm1d running_mean/running_var buffer updates (training-mode
    # side effects) are not materialized; only the forward output is produced.
    print("KERNEL_OK")
</pallas_src>

<mosaic_0001>
module attributes {stable_mosaic.version = 11 : i64} {
  func.func @_linear_bn_relu_kernel(%arg0: i32, %arg1: i32, %arg2: memref<8x128xf32, #tpu.memory_space<vmem>>, %arg3: memref<128x128xf32, #tpu.memory_space<vmem>>, %arg4: memref<2x128xf32, #tpu.memory_space<vmem>>, %arg5: memref<8x128xf32, #tpu.memory_space<vmem>>, %arg6: memref<8x128xf32, #tpu.memory_space<vmem>>) attributes {dimension_semantics = [#tpu.dimension_semantics<parallel>, #tpu.dimension_semantics<arbitrary>], iteration_bounds = array<i64: 1, 1>, scalar_prefetch = 0 : i64, scratch_operands = 1 : i64, tpu.core_type = #tpu.core_type<tc>, window_params = [{transform_indices = @transform_0, window_bounds = array<i64: 8, 128>}, {transform_indices = @transform_1, window_bounds = array<i64: 128, 128>}, {transform_indices = @transform_2, window_bounds = array<i64: 2, 128>}, {transform_indices = @transform_3, window_bounds = array<i64: 8, 128>}]} {
    %c0_i32 = arith.constant 0 : i32
    %0 = arith.cmpi eq, %arg1, %c0_i32 : i32
    %1 = arith.extui %0 : i1 to i32
    %c0_i32_0 = arith.constant 0 : i32
    %2 = arith.cmpi ne, %1, %c0_i32_0 : i32
    scf.if %2 {
      %cst_10 = arith.constant 0.000000e+00 : f32
      %12 = vector.broadcast %cst_10 : f32 to vector<8x128xf32>
      %c0_11 = arith.constant 0 : index
      %c0_12 = arith.constant 0 : index
      %13 = vector.load %arg6[%c0_11, %c0_12] : memref<8x128xf32, #tpu.memory_space<vmem>>, vector<8x128xf32>
      tpu.vector_store %arg6[%c0_11, %c0_12], %12 {strides = array<i32>} : memref<8x128xf32, #tpu.memory_space<vmem>>, vector<8x128xf32>,
    } else {
    }
    %c0 = arith.constant 0 : index
    %c0_1 = arith.constant 0 : index
    %3 = vector.load %arg6[%c0, %c0_1] : memref<8x128xf32, #tpu.memory_space<vmem>>, vector<8x128xf32>
    %c0_2 = arith.constant 0 : index
    %c0_3 = arith.constant 0 : index
    %4 = vector.load %arg2[%c0_2, %c0_3] : memref<8x128xf32, #tpu.memory_space<vmem>>, vector<8x128xf32>
    %c0_4 = arith.constant 0 : index
    %c0_5 = arith.constant 0 : index
    %5 = vector.load %arg3[%c0_4, %c0_5] : memref<128x128xf32, #tpu.memory_space<vmem>>, vector<128x128xf32>
    %cst = arith.constant dense<0.000000e+00> : vector<8x128xf32>
    %6 = tpu.matmul %4, %5, %cst {dimension_numbers = #tpu.dot_dimension_numbers<[1], [0], [0], [1], [0, 0, 1, 1], [], []>} : vector<8x128xf32>, vector<128x128xf32>, vector<8x128xf32> -> vector<8x128xf32>
    %7 = arith.addf %3, %6 : vector<8x128xf32>
    %c0_6 = arith.constant 0 : index
    %c0_7 = arith.constant 0 : index
    %8 = vector.load %arg6[%c0_6, %c0_7] : memref<8x128xf32, #tpu.memory_space<vmem>>, vector<8x128xf32>
    tpu.vector_store %arg6[%c0_6, %c0_7], %7 {strides = array<i32>} : memref<8x128xf32, #tpu.memory_space<vmem>>, vector<8x128xf32>,
    %c0_i32_8 = arith.constant 0 : i32
    %9 = arith.cmpi eq, %arg1, %c0_i32_8 : i32
    %10 = arith.extui %9 : i1 to i32
    %c0_i32_9 = arith.constant 0 : i32
    %11 = arith.cmpi ne, %10, %c0_i32_9 : i32
    scf.if %11 {
      %c0_10 = arith.constant 0 : index
      %c0_11 = arith.constant 0 : index
      %12 = vector.load %arg6[%c0_10, %c0_11] : memref<8x128xf32, #tpu.memory_space<vmem>>, vector<8x128xf32>
      %cst_12 = arith.constant dense<0.000000e+00> : vector<128xf32>
      %13 = vector.multi_reduction <add>, %12, %cst_12 [0] : vector<8x128xf32> to vector<128xf32>
      %14 = vector.shape_cast %13 : vector<128xf32> to vector<1x128xf32>
      %cst_13 = arith.constant 8.000000e+00 : f32
      %15 = vector.broadcast %cst_13 : f32 to vector<1x128xf32>
      %16 = arith.divf %14, %15 : vector<1x128xf32>
      %17 = vector.broadcast %16 : vector<1x128xf32> to vector<8x128xf32>
      %18 = arith.subf %12, %17 : vector<8x128xf32>
      %19 = arith.mulf %18, %18 : vector<8x128xf32>
      %cst_14 = arith.constant dense<0.000000e+00> : vector<128xf32>
      %20 = vector.multi_reduction <add>, %19, %cst_14 [0] : vector<8x128xf32> to vector<128xf32>
      %21 = vector.shape_cast %20 : vector<128xf32> to vector<1x128xf32>
      %cst_15 = arith.constant 8.000000e+00 : f32
      %22 = vector.broadcast %cst_15 : f32 to vector<1x128xf32>
      %23 = arith.divf %21, %22 : vector<1x128xf32>
      %c0_16 = arith.constant 0 : index
      %c0_17 = arith.constant 0 : index
      %24 = vector.load %arg4[%c0_16, %c0_17] : memref<2x128xf32, #tpu.memory_space<vmem>>, vector<1x128xf32>
      %c1 = arith.constant 1 : index
      %c0_18 = arith.constant 0 : index
      %25 = vector.load %arg4[%c1, %c0_18] : memref<2x128xf32, #tpu.memory_space<vmem>>, vector<1x128xf32>
      %cst_19 = arith.constant 9.99999974E-6 : f32
      %26 = vector.broadcast %cst_19 : f32 to vector<1x128xf32>
      %27 = arith.addf %23, %26 : vector<1x128xf32>
      %28 = math.rsqrt %27 : vector<1x128xf32>
      %29 = arith.mulf %24, %28 : vector<1x128xf32>
      %30 = arith.mulf %16, %29 : vector<1x128xf32>
      %31 = arith.subf %25, %30 : vector<1x128xf32>
      %32 = vector.broadcast %29 : vector<1x128xf32> to vector<8x128xf32>
      %33 = arith.mulf %12, %32 : vector<8x128xf32>
      %34 = vector.broadcast %31 : vector<1x128xf32> to vector<8x128xf32>
      %35 = arith.addf %33, %34 : vector<8x128xf32>
      %cst_20 = arith.constant 0.000000e+00 : f32
      %36 = vector.broadcast %cst_20 : f32 to vector<8x128xf32>
      %37 = arith.maximumf %35, %36 : vector<8x128xf32>
      %c0_21 = arith.constant 0 : index
      %c0_22 = arith.constant 0 : index
      %38 = vector.load %arg5[%c0_21, %c0_22] : memref<8x128xf32, #tpu.memory_space<vmem>>, vector<8x128xf32>
      tpu.vector_store %arg5[%c0_21, %c0_22], %37 {strides = array<i32>} : memref<8x128xf32, #tpu.memory_space<vmem>>, vector<8x128xf32>,
    } else {
    }
    return
  }
  func.func @transform_0(%arg0: i32, %arg1: i32) -> (i32, i32) {
    %c0_i32 = arith.constant 0 : i32
    %c0_i32_0 = arith.constant 0 : i32
    return %c0_i32, %arg1 : i32, i32
  }
  func.func @transform_1(%arg0: i32, %arg1: i32) -> (i32, i32) {
    %c0_i32 = arith.constant 0 : i32
    return %arg1, %arg0 : i32, i32
  }
  func.func @transform_2(%arg0: i32, %arg1: i32) -> (i32, i32) {
    %c0_i32 = arith.constant 0 : i32
    %c0_i32_0 = arith.constant 0 : i32
    return %c0_i32, %arg0 : i32, i32
  }
  func.func @transform_3(%arg0: i32, %arg1: i32) -> (i32, i32) {
    %c0_i32 = arith.constant 0 : i32
    %c0_i32_0 = arith.constant 0 : i32
    return %c0_i32, %arg0 : i32, i32
  }
}

</mosaic_0001>

<llo_original>
// kernel: tpu_custom_call.1
$region0: #{tpu_custom_call.1}
  #allocation0 [shape = 'u32[]', space=smem, size = 0x4, offset = 0x4, fixed_abs, tag = 'smem constant byte address 0x4 - core index']
  #allocation1 [shape = 'u32[144,128]{1,0:T(1,128)}', space=vmem, size = 0x12000, scoped, tag = 'internal scratch']
  #allocation2 [shape = 'f32[8,128]{1,0:T(8,128)}', space=vmem, size = 0x1000, scoped, tag = 'scratch operand']
  %s0 = inlined_call_operand.hbm [shape: f32[8,128], index: 0, kind: input, shape index: {}]
  %s1 = inlined_call_operand.hbm [shape: f32[128,128], index: 1, kind: input, shape index: {}]
  %s2 = inlined_call_operand.vmem [shape: f32[2,128], index: 2, kind: input, shape index: {}]
  %s3 = inlined_call_operand.hbm [shape: f32[8,128], index: 3, kind: output, shape index: {}]
  %s4 = sld [smem:[#allocation0]]
  $region38: #{tpu_custom_call.1} parent=0
    _
  %s6 = ssub.s32 1, %s4
  %s7 = scalar_select 0, %s6, %s4
  $region1: #{tpu_custom_call.1} parent=0
    #allocation3 [shape = 'u8[4096]{0}', space=vmem, size = 0x1000, scoped, tag = 'input window, operand 0, single buffered']
    #allocation4 [shape = 's32[1]{0}', space=sflag, size = 0x4, scoped, tag = 'scoped memory for tpu_custom_call.1']
    #allocation5 [shape = 's32[1]{0}', space=sflag, size = 0x4, scoped, tag = 'scoped memory for tpu_custom_call.1']
    #allocation6 [shape = 'u8[65536]{0}', space=vmem, size = 0x10000, scoped, tag = 'input window, operand 1, single buffered']
    #allocation7 [shape = 's32[1]{0}', space=sflag, size = 0x4, scoped, tag = 'scoped memory for tpu_custom_call.1']
    #allocation8 [shape = 'u8[4096]{0}', space=vmem, size = 0x1000, scoped, tag = 'output window, operand 0, single buffered']
    %8 = vsyncpa [#allocation4], 0
    %9 = vsyncpa [#allocation7], 0
    %10 = vsyncpa [#allocation5], 0
    // Predicated region
    $region2: #{tpu_custom_call.1} parent=1 // pred_check
      _
    $region3: #{tpu_custom_call.1} parent=1 // pred_check_branch
      %12 = sbr.rel (0) target = $region5
    $region4: #{tpu_custom_call.1} parent=1 // pred_region
      %s14 = ssub.s32 128, 128
      %15 = vsyncadd [#allocation4], %s14
      %s17 = sshll.u32 [#allocation3], 4
      %s18 = int_to_ptr.vmem [resolvable:$true] %s17
      %20 = dma.hbm_to_vmem [thread:$0]  %s0, 128, %s18, [#allocation4]
    $region5: #{tpu_custom_call.1} parent=1 // pred_fallthru
      _
    // Predicated region
    $region6: #{tpu_custom_call.1} parent=1 // pred_check
      _
    $region7: #{tpu_custom_call.1} parent=1 // pred_check_branch
      %22 = sbr.rel (0) target = $region9
    $region8: #{tpu_custom_call.1} parent=1 // pred_region
      %s24 = ssub.s32 2048, 2048
      %25 = vsyncadd [#allocation7], %s24
      %s26 = sshll.u32 [#allocation6], 4
      %s27 = int_to_ptr.vmem [resolvable:$true] %s26
      %32 = dma.hbm_to_vmem [thread:$0]  %s1, 2048, %s27, [#allocation7], 128, 128, 8
    $region9: #{tpu_custom_call.1} parent=1 // pred_fallthru
      _
    // Predicated region
    $region10: #{tpu_custom_call.1} parent=1 // pred_check
      _
    $region11: #{tpu_custom_call.1} parent=1 // pred_check_branch
      %34 = sbr.rel (0) target = $region13
    $region12: #{tpu_custom_call.1} parent=1 // pred_region
      _
    $region13: #{tpu_custom_call.1} parent=1 // pred_fallthru
      _
    // Predicated region
    $region14: #{tpu_custom_call.1} parent=1 // pred_check
      _
    $region15: #{tpu_custom_call.1} parent=1 // pred_check_branch
      %36 = sbr.rel (0) target = $region17
    $region16: #{tpu_custom_call.1} parent=1 // pred_region
      %37 = dma.done [#allocation4], 128
    $region17: #{tpu_custom_call.1} parent=1 // pred_fallthru
      _
    // Predicated region
    $region18: #{tpu_custom_call.1} parent=1 // pred_check
      _
    $region19: #{tpu_custom_call.1} parent=1 // pred_check_branch
      %39 = sbr.rel (0) target = $region21
    $region20: #{tpu_custom_call.1} parent=1 // pred_region
      %40 = dma.done [#allocation7], 2048
    $region21: #{tpu_custom_call.1} parent=1 // pred_fallthru
      _
    %p41 = scmp.eq.s32.totalorder 0, 0
    // Predicated region
    $region22: #{tpu_custom_call.1} parent=1 // pred_check
      %p42 = pneg %p41
    $region23: #{tpu_custom_call.1} parent=1 // pred_check_branch
      %44 = sbr.rel (%p42) target = $region25
    $region24: #{tpu_custom_call.1} parent=1 // pred_region
      %45 = vst [vmem:[#allocation2] sm:$0xff] 0.0
    $region25: #{tpu_custom_call.1} parent=1 // pred_fallthru
      _
    %v46 = vld [vmem:[#allocation2] sm:$0xff]
    %v47 = vld [vmem:[#allocation3] sm:$0xff]
    %v48 = vld [vmem:[#allocation6] sm:$0xff]
    %v49 = vld [vmem:[#allocation6 + $0x8] sm:$0xff]
    %v50 = vld [vmem:[#allocation6 + $0x10] sm:$0xff]
    %v51 = vld [vmem:[#allocation6 + $0x18] sm:$0xff]
    %v52 = vld [vmem:[#allocation6 + $0x20] sm:$0xff]
    %v53 = vld [vmem:[#allocation6 + $0x28] sm:$0xff]
    %v54 = vld [vmem:[#allocation6 + $0x30] sm:$0xff]
    %v55 = vld [vmem:[#allocation6 + $0x38] sm:$0xff]
    %v56 = vld [vmem:[#allocation6 + $0x40] sm:$0xff]
    %v57 = vld [vmem:[#allocation6 + $0x48] sm:$0xff]
    %v58 = vld [vmem:[#allocation6 + $0x50] sm:$0xff]
    %v59 = vld [vmem:[#allocation6 + $0x58] sm:$0xff]
    %v60 = vld [vmem:[#allocation6 + $0x60] sm:$0xff]
    %v61 = vld [vmem:[#allocation6 + $0x68] sm:$0xff]
    %v62 = vld [vmem:[#allocation6 + $0x70] sm:$0xff]
    %v63 = vld [vmem:[#allocation6 + $0x78] sm:$0xff]
    %64 = vmatprep.subr.mxu0 0.0
    %65 = vmatpush1.msra.mxu0 %v48
    %66 = vmatprep.subr.mxu0 0.0
    %67 = vmatpush1.msra.mxu0 %v49
    %68 = vmatprep.subr.mxu0 0.0
    %69 = vmatpush1.msra.mxu0 %v50
    %70 = vmatprep.subr.mxu0 0.0
    %71 = vmatpush1.msra.mxu0 %v51
    %72 = vmatprep.subr.mxu0 0.0
    %73 = vmatpush1.msra.mxu0 %v52
    %74 = vmatprep.subr.mxu0 0.0
    %75 = vmatpush1.msra.mxu0 %v53
    %76 = vmatprep.subr.mxu0 0.0
    %77 = vmatpush1.msra.mxu0 %v54
    %78 = vmatprep.subr.mxu0 0.0
    %79 = vmatpush1.msra.mxu0 %v55
    %80 = vmatprep.subr.mxu0 0.0
    %81 = vmatpush1.msra.mxu0 %v56
    %82 = vmatprep.subr.mxu0 0.0
    %83 = vmatpush1.msra.mxu0 %v57
    %84 = vmatprep.subr.mxu0 0.0
    %85 = vmatpush1.msra.mxu0 %v58
    %86 = vmatprep.subr.mxu0 0.0
    %87 = vmatpush1.msra.mxu0 %v59
    %88 = vmatprep.subr.mxu0 0.0
    %89 = vmatpush1.msra.mxu0 %v60
    %90 = vmatprep.subr.mxu0 0.0
    %91 = vmatpush1.msra.mxu0 %v61
    %92 = vmatprep.subr.mxu0 0.0
    %93 = vmatpush1.msra.mxu0 %v62
    %94 = vmatprep.subr.mxu0 0.0
    %95 = vmatpush1.msra.mxu0 %v63
    %96 = vmatprep.subr.mxu0 0.0
    %97 = vmatpush1.msra.mxu0 0.0
    %98 = vmatprep.subr.mxu0 0.0
    %99 = vmatpush1.msra.mxu0 0.0
    %100 = vmatprep.subr.mxu0 0.0
    %101 = vmatpush1.msra.mxu0 0.0
    %102 = vmatprep.subr.mxu0 0.0
    %103 = vmatpush1.msra.mxu0 0.0
    %104 = vmatprep.subr.mxu0 0.0
    %105 = vmatpush1.msra.mxu0 0.0
    %106 = vmatprep.subr.mxu0 0.0
    %107 = vmatpush1.msra.mxu0 0.0
    %108 = vmatprep.subr.mxu0 0.0
    %109 = vmatpush1.msra.mxu0 0.0
    %110 = vmatprep.subr.mxu0 0.0
    %111 = vmatpush1.msra.mxu0 0.0
    %112 = vmatprep.subr.mxu0 0.0
    %113 = vmatpush1.msra.mxu0 0.0
    %114 = vmatprep.subr.mxu0 0.0
    %115 = vmatpush1.msra.mxu0 0.0
    %116 = vmatprep.subr.mxu0 0.0
    %117 = vmatpush1.msra.mxu0 0.0
    %118 = vmatprep.subr.mxu0 0.0
    %119 = vmatpush1.msra.mxu0 0.0
    %120 = vmatprep.subr.mxu0 0.0
    %121 = vmatpush1.msra.mxu0 0.0
    %122 = vmatprep.subr.mxu0 0.0
    %123 = vmatpush1.msra.mxu0 0.0
    %124 = vmatprep.subr.mxu0 0.0
    %125 = vmatpush1.msra.mxu0 0.0
    %126 = vmatprep.subr.mxu0 0.0
    %127 = vmatpush1.msra.mxu0 0.0
    %128 = vmatprep.mubr.f32.mxu0 0.0
    %129 = vmatmul.mubr.f32.gmra.mrb[0].mxu0 %v47
    %v130 = vpop.f32.mrb[0].mxu0
    %v131 = vadd.f32 0.0, %v130
    %v132 = vpop.f32.mrb[0].mxu0
    %133 = vdwg.mxu0
    %v134 = vadd.f32 %v46, %v131
    %135 = vst [vmem:[#allocation2] sm:$0xff] %v134
    // Predicated region
    $region26: #{tpu_custom_call.1} parent=1 // pred_check
      %p136 = pneg %p41
    $region27: #{tpu_custom_call.1} parent=1 // pred_check_branch
      %138 = sbr.rel (%p136) target = $region29
    $region28: #{tpu_custom_call.1} parent=1 // pred_region
      %v139 = vld [vmem:[#allocation2] sm:$0xff]
      %v140 = vrot.slane %v139, 4
      %v141 = vadd.f32 %v139, %v140
      %v142 = vrot.slane %v141, 2
      %v143 = vadd.f32 %v141, %v142
      %v144 = vrot.slane %v143, 1
      %v145 = vadd.f32 %v143, %v144
      %v146 = vrcp.pop 8.0
      %v147 = vmul.f32 %v145, %v146
      %v148 = vsub.f32 %v139, %v147
      %v149 = vmul.f32 %v148, %v148
      %v150 = vrot.slane %v149, 4
      %v151 = vadd.f32 %v149, %v150
      %v152 = vrot.slane %v151, 2
      %v153 = vadd.f32 %v151, %v152
      %v154 = vrot.slane %v153, 1
      %v155 = vadd.f32 %v153, %v154
      %v156 = vmul.f32 %v155, %v146
      %v157 = vld [vmem:[%s2] sm:$0x1]
      %v158 = vld [vmem:[%s2 + $0x1] sm:$0x1]
      %v159 = vadd.f32 %v156, 1e-05
      %v160 = vrsqrt.pop %v159
      %v161 = vmul.f32 %v157, %v160
      %v162 = vmul.f32 %v147, %v161
      %v163 = vsub.f32 %v158, %v162
      %v164 = vlaneseq
      %v165 = vshrl.u32 %v164, 7
      %v166 = vsub.s32 0, %v165
      %v167 = vrot.slane %v161, %v166
      %v168 = vmul.f32 %v139, %v167
      %v169 = vlaneseq
      %v170 = vshrl.u32 %v169, 7
      %v171 = vsub.s32 0, %v170
      %v172 = vrot.slane %v163, %v171
      %v173 = vadd.f32 %v168, %v172
      %v174 = vmax.f32 %v173, 0.0
      %175 = vst [vmem:[#allocation8] sm:$0xff] %v174
    $region29: #{tpu_custom_call.1} parent=1 // pred_fallthru
      _
    // Predicated region
    $region30: #{tpu_custom_call.1} parent=1 // pred_check
      _
    $region31: #{tpu_custom_call.1} parent=1 // pred_check_branch
      %177 = sbr.rel (0) target = $region33
    $region32: #{tpu_custom_call.1} parent=1 // pred_region
      %s179 = ssub.s32 128, 128
      %180 = vsyncadd [#allocation5], %s179
      %s182 = sshll.u32 [#allocation8], 4
      %s183 = int_to_ptr.vmem [resolvable:$true] %s182
      %185 = dma.vmem_to_hbm [thread:$0]  %s183, 128, %s3, [#allocation5]
    $region33: #{tpu_custom_call.1} parent=1 // pred_fallthru
      _
    // Predicated region
    $region34: #{tpu_custom_call.1} parent=1 // pred_check
      _
    $region35: #{tpu_custom_call.1} parent=1 // pred_check_branch
      %187 = sbr.rel (0) target = $region37
    $region36: #{tpu_custom_call.1} parent=1 // pred_region
      %188 = dma.done [#allocation5], 128
    $region37: #{tpu_custom_call.1} parent=1 // pred_fallthru
      _
    %189 = vsyncpa [#allocation4], 1
    %190 = vsyncpa [#allocation7], 1
    %191 = vsyncpa [#allocation5], 1

</llo_original>
